<compile_context>
chip_gen: v7x
topology: tpu7x:2x2x1
jax: 0.10.0
libtpu: 0.0.40
codegen_flags: <defaults>
</compile_context>

<pallas_src>
import jax
import jax.numpy as jnp
from jax.experimental import pallas as pl
from jax.experimental.pallas import tpu as pltpu

_EPS = 1e-8  # matches torch.nn.CosineSimilarity default


def _cosine_score_kernel(wt_ref, e1_ref, e2_ref, out_ref):
    """One batch tile.

    wt_ref : [d_out, d_in]  fused, pre-transposed weight (constant index_map,
                            VMEM-resident across grid steps).
    e1_ref : [d_in,  tB]    embeds1 tile (batch in lanes).
    e2_ref : [d_out, tB]    embeds2 tile.
    out_ref: [1,     tB]    cosine similarity per batch column (f32).
    """
    # Single MXU matmul per tile: act[j, b] = sum_i W[i, j] * e1[i, b].
    act = jnp.dot(wt_ref[...], e1_ref[...],
                  preferred_element_type=jnp.float32)            # [d_out, tB]
    e2 = e2_ref[...].astype(jnp.float32)

    # Cosine similarity along the feature axis (dim 0), per batch column.
    num = jnp.sum(act * e2, axis=0, keepdims=True)               # [1, tB]
    act_sq = jnp.sum(act * act, axis=0, keepdims=True)
    e2_sq = jnp.sum(e2 * e2, axis=0, keepdims=True)
    denom = (jnp.maximum(jnp.sqrt(act_sq), _EPS)
             * jnp.maximum(jnp.sqrt(e2_sq), _EPS))
    # Divide via EUP reciprocal (exact); keeps the VPU slot for the reduces.
    out_ref[...] = (num * pl.reciprocal(denom, approx=False)).astype(
        out_ref.dtype)


def bilinear_blockdiag_cosine(wt, embeds1, embeds2, *,
                              batch_tile=2048, use_bf16=False):
    """wt: [d_out, d_in] fused pre-transposed weight; embeds1: [d_in, B];
    embeds2: [d_out, B].  Returns cosine similarities, shape [B], float32."""
    d_out, d_in = wt.shape
    d_in1, B = embeds1.shape
    d_out2, B2 = embeds2.shape
    assert d_in1 == d_in and d_out2 == d_out and B2 == B

    if use_bf16:
        # Halves HBM traffic of the streamed embeddings (the real bottleneck)
        # and the VMEM tile footprint.  MXU accumulate + cosine math stay f32.
        wt = wt.astype(jnp.bfloat16)
        embeds1 = embeds1.astype(jnp.bfloat16)
        embeds2 = embeds2.astype(jnp.bfloat16)
    itemsize = jnp.dtype(embeds1.dtype).itemsize

    # ---- Batch tile (lane axis).  Full block when B is small; otherwise
    # 128-multiple tiles, auto-shrunk so the double-buffered streams stay well
    # inside v7x's 64 MiB per-TC VMEM.  No host-side padding: the ragged last
    # tile (if any) relies on Pallas boundary masking; output columns only
    # depend on their own input columns, so padded lanes are harmless.
    if B <= batch_tile:
        tB = B
    else:
        assert batch_tile % 128 == 0
        tB = batch_tile
        budget = 40 << 20
        while tB > 128 and 2 * itemsize * tB * (d_in + d_out) > budget:
            tB //= 2
    num_steps = pl.cdiv(B, tB)

    in_specs = [
        # Fused weight: constant index_map -> stays VMEM-resident, no re-DMA.
        pl.BlockSpec((d_out, d_in), lambda b: (0, 0)),
        pl.BlockSpec((d_in, tB), lambda b: (0, b)),
        pl.BlockSpec((d_out, tB), lambda b: (0, b)),
    ]
    out_specs = pl.BlockSpec((1, tB), lambda b: (0, b))

    # ---- VMEM budget: double-buffered streamed tiles + resident weight +
    # headroom, capped below v7x's 64 MiB per-TC physical VMEM.
    stream_bytes = itemsize * tB * (d_in + d_out) + 4 * tB
    w_bytes = itemsize * d_out * d_in
    vmem_limit = int(min(max(2 * stream_bytes + 2 * w_bytes + (4 << 20),
                             8 << 20), 48 << 20))

    # ---- Advisory cost estimate (post-hoisting: one matmul + cosine per tile).
    cost = pl.CostEstimate(
        flops=int(2 * d_in * d_out * B + 6 * d_out * B),
        transcendentals=int(3 * B),
        bytes_accessed=int(itemsize * (embeds1.size + embeds2.size + wt.size)
                           + 4 * B))

    out = pl.pallas_call(
        _cosine_score_kernel,
        out_shape=jax.ShapeDtypeStruct((1, B), jnp.float32),
        grid=(num_steps,),
        in_specs=in_specs,
        out_specs=out_specs,
        compiler_params=pltpu.CompilerParams(
            dimension_semantics=("parallel",),   # megacore-shard batch on v7x
            vmem_limit_bytes=vmem_limit),
        cost_estimate=cost,
    )(wt, embeds1, embeds2)
    return out[0]


class BilinearBlockDiagPos2FeatMatMetapathDecoder:
    """JAX port of the PyTorch module (forward pass). Xavier-uniform init."""

    def __init__(self, relations, dims, feat_dims, spa_embed_dim, key):
        self.relations = relations
        self.dims = dims
        self.feat_dims = feat_dims
        self.spa_embed_dim = spa_embed_dim
        self.feat_mats = {}
        self.pos_mats = {}
        self.pos2feat_mats = {}

        def xavier(k, shape):
            limit = (6.0 / (shape[0] + shape[1])) ** 0.5
            return jax.random.uniform(k, shape, jnp.float32, -limit, limit)

        for r1 in sorted(relations):
            for r2 in relations[r1]:
                rel = (r1, r2[1], r2[0])
                key, k1, k2, k3 = jax.random.split(key, 4)
                self.feat_mats[rel] = xavier(
                    k1, (feat_dims[rel[0]], feat_dims[rel[2]]))
                self.pos_mats[rel] = xavier(
                    k2, (spa_embed_dim, spa_embed_dim))
                self.pos2feat_mats[rel] = xavier(
                    k3, (spa_embed_dim, feat_dims[rel[2]]))

    def _fused_weight(self, rels, do_spa_sem_lift):
        """Collapse the relation chain + feat/pos branches into one weight.

        Hoisted out of the kernel (the tiny [d,d] chain matmuls run once per
        forward in XLA).  Mathematically identical to the PyTorch
        left-to-right loop up to fp reassociation (~1e-6 relative).
        Returns W^T of shape [d_out, d_in]."""
        if do_spa_sem_lift:
            Mf = self.pos2feat_mats[rels[0]]
            Mp = self.pos_mats[rels[0]]
            for r in rels[1:]:
                Mf = Mf @ self.feat_mats[r]
                Mp = Mp @ self.pos_mats[r]
            W = jnp.concatenate([Mf, Mp], axis=1)              # [spa, d_out]
        else:
            Mf = self.feat_mats[rels[0]]
            Mp = self.pos_mats[rels[0]]
            for r in rels[1:]:
                Mf = Mf @ self.feat_mats[r]
                Mp = Mp @ self.pos_mats[r]
            zf = jnp.zeros((Mf.shape[0], Mp.shape[1]), Mf.dtype)
            zp = jnp.zeros((Mp.shape[0], Mf.shape[1]), Mp.dtype)
            W = jnp.concatenate(
                [jnp.concatenate([Mf, zf], axis=1),
                 jnp.concatenate([zp, Mp], axis=1)], axis=0)   # [d_in, d_out]
        return W.T

    def forward(self, embeds1, embeds2, rels, do_spa_sem_lift=False,
                batch_tile=2048, use_bf16=False):
        if do_spa_sem_lift:
            assert embeds1.shape[0] == self.spa_embed_dim
        wt = self._fused_weight(rels, do_spa_sem_lift)
        return bilinear_blockdiag_cosine(
            wt, embeds1, embeds2, batch_tile=batch_tile, use_bf16=use_bf16)

    # TODO(synk): `project` (single-relation projection without the cosine)
    # reuses the same fused-weight machinery; omitted since only forward is
    # required here.


def _reference_forward(dec, embeds1, embeds2, rels, do_spa_sem_lift=False):
    """Pure-JAX mirror of the PyTorch left-to-right computation."""
    act = embeds1.T
    if do_spa_sem_lift:
        feat_act = act @ dec.pos2feat_mats[rels[0]]
        pos_act = act @ dec.pos_mats[rels[0]]
        for r in rels[1:]:
            feat_act = feat_act @ dec.feat_mats[r]
            pos_act = pos_act @ dec.pos_mats[r]
    else:
        fd = dec.feat_dims[rels[0][0]]
        feat_act, pos_act = act[:, :fd], act[:, fd:]
        for r in rels:
            feat_act = feat_act @ dec.feat_mats[r]
            pos_act = pos_act @ dec.pos_mats[r]
    act = jnp.concatenate([feat_act, pos_act], axis=1).T       # [d_out, B]
    num = jnp.sum(act * embeds2, axis=0)
    n1 = jnp.maximum(jnp.sqrt(jnp.sum(act * act, axis=0)), _EPS)
    n2 = jnp.maximum(jnp.sqrt(jnp.sum(embeds2 * embeds2, axis=0)), _EPS)
    return num / (n1 * n2)


if __name__ == "__main__":
    key = jax.random.PRNGKey(0)

    # Small synthetic metapath schema: A --r1--> B --r2--> C
    relations = {"A": [("B", "r1")], "B": [("C", "r2")]}
    feat_dims = {"A": 32, "B": 64, "C": 32}
    spa_embed_dim = 16
    dims = {t: feat_dims[t] + spa_embed_dim for t in feat_dims}
    rels = [("A", "r1", "B"), ("B", "r2", "C")]
    d_in = dims["A"]                          # 48
    d_out = feat_dims["C"] + spa_embed_dim    # 48

    k_dec, k_e1, k_e1l, k_e2, k_e1b, k_e2b = jax.random.split(key, 6)
    dec = BilinearBlockDiagPos2FeatMatMetapathDecoder(
        relations, dims, feat_dims, spa_embed_dim, k_dec)

    # ---- Small single-tile test (default block-diagonal split path).
    batch = 16
    embeds1 = jax.random.normal(k_e1, (d_in, batch), dtype=jnp.float32)
    embeds2 = jax.random.normal(k_e2, (d_out, batch), dtype=jnp.float32)
    out = jax.block_until_ready(dec.forward(embeds1, embeds2, rels))
    ref = _reference_forward(dec, embeds1, embeds2, rels)
    assert out.shape == (batch,)
    assert jnp.allclose(out, ref, rtol=1e-4, atol=1e-4), "mismatch (default)"

    # ---- Spatial-to-semantic lift path.
    embeds1_lift = jax.random.normal(k_e1l, (spa_embed_dim, batch),
                                     dtype=jnp.float32)
    out_l = jax.block_until_ready(
        dec.forward(embeds1_lift, embeds2, rels, do_spa_sem_lift=True))
    ref_l = _reference_forward(dec, embeds1_lift, embeds2, rels,
                               do_spa_sem_lift=True)
    assert out_l.shape == (batch,)
    assert jnp.allclose(out_l, ref_l, rtol=1e-4, atol=1e-4), "mismatch (lift)"

    # ---- Multi-tile test (exercises the batch grid / pipeline).
    big_batch = 384
    embeds1_b = jax.random.normal(k_e1b, (d_in, big_batch), dtype=jnp.float32)
    embeds2_b = jax.random.normal(k_e2b, (d_out, big_batch), dtype=jnp.float32)
    out_b = jax.block_until_ready(
        dec.forward(embeds1_b, embeds2_b, rels, batch_tile=128))
    ref_b = _reference_forward(dec, embeds1_b, embeds2_b, rels)
    assert out_b.shape == (big_batch,)
    assert jnp.allclose(out_b, ref_b, rtol=1e-4, atol=1e-4), "mismatch (tiled)"

    # ---- bf16-streamed variant (v6e/v7x bandwidth option, f32 reductions).
    out_bf = jax.block_until_ready(
        dec.forward(embeds1_b, embeds2_b, rels, batch_tile=128, use_bf16=True))
    assert jnp.allclose(out_bf, ref_b, rtol=5e-2, atol=5e-2), "mismatch (bf16)"

    print("KERNEL_OK")
</pallas_src>

<mosaic_0001>
module attributes {stable_mosaic.version = 11 : i64} {
  func.func @_cosine_score_kernel(%arg0: i32, %arg1: memref<48x48xf32, #tpu.memory_space<vmem>>, %arg2: memref<48x16xf32, #tpu.memory_space<vmem>>, %arg3: memref<48x16xf32, #tpu.memory_space<vmem>>, %arg4: memref<1x16xf32, #tpu.memory_space<vmem>>) attributes {dimension_semantics = [#tpu.dimension_semantics<parallel>], iteration_bounds = array<i64: 1>, scalar_prefetch = 0 : i64, scratch_operands = 0 : i64, tpu.core_type = #tpu.core_type<tc>, window_params = [{pipeline_mode = #tpu.pipeline_mode<synchronous>, transform_indices = @transform_0, window_bounds = array<i64: 48, 48>}, {transform_indices = @transform_1, window_bounds = array<i64: 48, 16>}, {transform_indices = @transform_2, window_bounds = array<i64: 48, 16>}, {transform_indices = @transform_3, window_bounds = array<i64: 1, 16>}]} {
    %c0 = arith.constant 0 : index
    %c0_0 = arith.constant 0 : index
    %0 = vector.load %arg1[%c0, %c0_0] : memref<48x48xf32, #tpu.memory_space<vmem>>, vector<48x48xf32>
    %c0_1 = arith.constant 0 : index
    %c0_2 = arith.constant 0 : index
    %1 = vector.load %arg2[%c0_1, %c0_2] : memref<48x16xf32, #tpu.memory_space<vmem>>, vector<48x16xf32>
    %cst = arith.constant dense<0.000000e+00> : vector<48x16xf32>
    %2 = tpu.matmul %0, %1, %cst {dimension_numbers = #tpu.dot_dimension_numbers<[1], [0], [0], [1], [0, 0, 1, 1], [], []>} : vector<48x48xf32>, vector<48x16xf32>, vector<48x16xf32> -> vector<48x16xf32>
    %c0_3 = arith.constant 0 : index
    %c0_4 = arith.constant 0 : index
    %3 = vector.load %arg3[%c0_3, %c0_4] : memref<48x16xf32, #tpu.memory_space<vmem>>, vector<48x16xf32>
    %4 = arith.mulf %2, %3 : vector<48x16xf32>
    %cst_5 = arith.constant dense<0.000000e+00> : vector<16xf32>
    %5 = vector.multi_reduction <add>, %4, %cst_5 [0] : vector<48x16xf32> to vector<16xf32>
    %6 = vector.shape_cast %5 : vector<16xf32> to vector<1x16xf32>
    %7 = arith.mulf %2, %2 : vector<48x16xf32>
    %cst_6 = arith.constant dense<0.000000e+00> : vector<16xf32>
    %8 = vector.multi_reduction <add>, %7, %cst_6 [0] : vector<48x16xf32> to vector<16xf32>
    %9 = vector.shape_cast %8 : vector<16xf32> to vector<1x16xf32>
    %10 = arith.mulf %3, %3 : vector<48x16xf32>
    %cst_7 = arith.constant dense<0.000000e+00> : vector<16xf32>
    %11 = vector.multi_reduction <add>, %10, %cst_7 [0] : vector<48x16xf32> to vector<16xf32>
    %12 = vector.shape_cast %11 : vector<16xf32> to vector<1x16xf32>
    %13 = math.sqrt %9 : vector<1x16xf32>
    %cst_8 = arith.constant 9.99999993E-9 : f32
    %14 = vector.broadcast %cst_8 : f32 to vector<1x16xf32>
    %15 = arith.maximumf %13, %14 : vector<1x16xf32>
    %16 = math.sqrt %12 : vector<1x16xf32>
    %cst_9 = arith.constant 9.99999993E-9 : f32
    %17 = vector.broadcast %cst_9 : f32 to vector<1x16xf32>
    %18 = arith.maximumf %16, %17 : vector<1x16xf32>
    %19 = arith.mulf %15, %18 : vector<1x16xf32>
    %20 = tpu.reciprocal %19 : vector<1x16xf32> -> vector<1x16xf32>
    %21 = arith.mulf %6, %20 : vector<1x16xf32>
    %c0_10 = arith.constant 0 : index
    %c0_11 = arith.constant 0 : index
    %22 = vector.load %arg4[%c0_10, %c0_11] : memref<1x16xf32, #tpu.memory_space<vmem>>, vector<1x16xf32>
    tpu.vector_store %arg4[%c0_10, %c0_11], %21 {strides = array<i32>} : memref<1x16xf32, #tpu.memory_space<vmem>>, vector<1x16xf32>,
    return
  }
  func.func @transform_0(%arg0: i32) -> (i32, i32) {
    %c0_i32 = arith.constant 0 : i32
    %c0_i32_0 = arith.constant 0 : i32
    %c0_i32_1 = arith.constant 0 : i32
    return %c0_i32, %c0_i32_0 : i32, i32
  }
  func.func @transform_1(%arg0: i32) -> (i32, i32) {
    %c0_i32 = arith.constant 0 : i32
    %c0_i32_0 = arith.constant 0 : i32
    return %c0_i32, %arg0 : i32, i32
  }
  func.func @transform_2(%arg0: i32) -> (i32, i32) {
    %c0_i32 = arith.constant 0 : i32
    %c0_i32_0 = arith.constant 0 : i32
    return %c0_i32, %arg0 : i32, i32
  }
  func.func @transform_3(%arg0: i32) -> (i32, i32) {
    %c0_i32 = arith.constant 0 : i32
    %c0_i32_0 = arith.constant 0 : i32
    return %c0_i32, %arg0 : i32, i32
  }
}

</mosaic_0001>

<llo_original>
// kernel: tpu_custom_call.1
$region0: #{tpu_custom_call.1}
  #allocation0 [shape = 'u32[]', space=smem, size = 0x4, offset = 0x4, fixed_abs, tag = 'smem constant byte address 0x4 - core index']
  #allocation1 [shape = 'u32[144,128]{1,0:T(1,128)}', space=vmem, size = 0x12000, scoped, tag = 'internal scratch']
  %s0 = inlined_call_operand.vmem [shape: f32[48,48], index: 0, kind: input, shape index: {}]
  %s1 = inlined_call_operand.vmem [shape: f32[48,16], index: 1, kind: input, shape index: {}]
  %s2 = inlined_call_operand.vmem [shape: f32[48,16], index: 2, kind: input, shape index: {}]
  %s3 = inlined_call_operand.hbm [shape: f32[1,16], index: 3, kind: output, shape index: {}]
  %s4 = sld [smem:[#allocation0]]
  $region22: #{tpu_custom_call.1} parent=0
    _
  %s6 = ssub.s32 1, %s4
  %s7 = scalar_select 0, %s6, %s4
  $region1: #{tpu_custom_call.1} parent=0
    #allocation2 [shape = 'u8[512]{0}', space=vmem, size = 0x400, scoped, tag = 'output window, operand 0, single buffered']
    #allocation3 [shape = 's32[1]{0}', space=sflag, size = 0x4, scoped, tag = 'scoped memory for tpu_custom_call.1']
    %8 = vsyncpa [#allocation3], 0
    // Predicated region
    $region2: #{tpu_custom_call.1} parent=1 // pred_check
      _
    $region3: #{tpu_custom_call.1} parent=1 // pred_check_branch
      %10 = sbr.rel (0) target = $region5
    $region4: #{tpu_custom_call.1} parent=1 // pred_region
      _
    $region5: #{tpu_custom_call.1} parent=1 // pred_fallthru
      _
    // Predicated region
    $region6: #{tpu_custom_call.1} parent=1 // pred_check
      _
    $region7: #{tpu_custom_call.1} parent=1 // pred_check_branch
      %12 = sbr.rel (0) target = $region9
    $region8: #{tpu_custom_call.1} parent=1 // pred_region
      _
    $region9: #{tpu_custom_call.1} parent=1 // pred_fallthru
      _
    // Predicated region
    $region10: #{tpu_custom_call.1} parent=1 // pred_check
      _
    $region11: #{tpu_custom_call.1} parent=1 // pred_check_branch
      %14 = sbr.rel (0) target = $region13
    $region12: #{tpu_custom_call.1} parent=1 // pred_region
      _
    $region13: #{tpu_custom_call.1} parent=1 // pred_fallthru
      _
    %v15 = vld [vmem:[%s0] sm:$0xff]
    %v16 = vld [vmem:[%s0 + $0x8] sm:$0xff]
    %v17 = vld [vmem:[%s0 + $0x10] sm:$0xff]
    %v18 = vld [vmem:[%s0 + $0x18] sm:$0xff]
    %v19 = vld [vmem:[%s0 + $0x20] sm:$0xff]
    %v20 = vld [vmem:[%s0 + $0x28] sm:$0xff]
    %v21 = vld [vmem:[%s1] sm:$0xff]
    %v22 = vld [vmem:[%s1 + $0x8] sm:$0xff]
    %v23 = vld [vmem:[%s1 + $0x10] sm:$0xff]
    %v24 = vld [vmem:[%s1 + $0x18] sm:$0xff]
    %v25 = vld [vmem:[%s1 + $0x20] sm:$0xff]
    %v26 = vld [vmem:[%s1 + $0x28] sm:$0xff]
    %vm27 = vcmask 392192
    %v29 = vsel %vm27, %v15, 0
    %v32 = vsel %vm27, %v16, 0
    %v35 = vsel %vm27, %v17, 0
    %v38 = vsel %vm27, %v18, 0
    %v41 = vsel %vm27, %v19, 0
    %v44 = vsel %vm27, %v20, 0
    %46 = vmatprep.subr.mxu0 0.0
    %47 = vmatpush1.msra.mxu0 %v21
    %48 = vmatprep.subr.mxu0 0.0
    %49 = vmatpush1.msra.mxu0 %v22
    %50 = vmatprep.subr.mxu0 0.0
    %51 = vmatpush1.msra.mxu0 %v23
    %52 = vmatprep.subr.mxu0 0.0
    %53 = vmatpush1.msra.mxu0 %v24
    %54 = vmatprep.subr.mxu0 0.0
    %55 = vmatpush1.msra.mxu0 %v25
    %56 = vmatprep.subr.mxu0 0.0
    %57 = vmatpush1.msra.mxu0 %v26
    %58 = vmatprep.subr.mxu0 0.0
    %59 = vmatpush1.msra.mxu0 0.0
    %60 = vmatprep.subr.mxu0 0.0
    %61 = vmatpush1.msra.mxu0 0.0
    %62 = vmatprep.subr.mxu0 0.0
    %63 = vmatpush1.msra.mxu0 0.0
    %64 = vmatprep.subr.mxu0 0.0
    %65 = vmatpush1.msra.mxu0 0.0
    %66 = vmatprep.subr.mxu0 0.0
    %67 = vmatpush1.msra.mxu0 0.0
    %68 = vmatprep.subr.mxu0 0.0
    %69 = vmatpush1.msra.mxu0 0.0
    %70 = vmatprep.subr.mxu0 0.0
    %71 = vmatpush1.msra.mxu0 0.0
    %72 = vmatprep.subr.mxu0 0.0
    %73 = vmatpush1.msra.mxu0 0.0
    %74 = vmatprep.subr.mxu0 0.0
    %75 = vmatpush1.msra.mxu0 0.0
    %76 = vmatprep.subr.mxu0 0.0
    %77 = vmatpush1.msra.mxu0 0.0
    %78 = vmatprep.subr.mxu0 0.0
    %79 = vmatpush1.msra.mxu0 0.0
    %80 = vmatprep.subr.mxu0 0.0
    %81 = vmatpush1.msra.mxu0 0.0
    %82 = vmatprep.subr.mxu0 0.0
    %83 = vmatpush1.msra.mxu0 0.0
    %84 = vmatprep.subr.mxu0 0.0
    %85 = vmatpush1.msra.mxu0 0.0
    %86 = vmatprep.subr.mxu0 0.0
    %87 = vmatpush1.msra.mxu0 0.0
    %88 = vmatprep.subr.mxu0 0.0
    %89 = vmatpush1.msra.mxu0 0.0
    %90 = vmatprep.subr.mxu0 0.0
    %91 = vmatpush1.msra.mxu0 0.0
    %92 = vmatprep.subr.mxu0 0.0
    %93 = vmatpush1.msra.mxu0 0.0
    %94 = vmatprep.subr.mxu0 0.0
    %95 = vmatpush1.msra.mxu0 0.0
    %96 = vmatprep.subr.mxu0 0.0
    %97 = vmatpush1.msra.mxu0 0.0
    %98 = vmatprep.subr.mxu0 0.0
    %99 = vmatpush1.msra.mxu0 0.0
    %100 = vmatprep.subr.mxu0 0.0
    %101 = vmatpush1.msra.mxu0 0.0
    %102 = vmatprep.subr.mxu0 0.0
    %103 = vmatpush1.msra.mxu0 0.0
    %104 = vmatprep.subr.mxu0 0.0
    %105 = vmatpush1.msra.mxu0 0.0
    %106 = vmatprep.subr.mxu0 0.0
    %107 = vmatpush1.msra.mxu0 0.0
    %108 = vmatprep.subr.mxu0 0.0
    %109 = vmatpush1.msra.mxu0 0.0
    %110 = vmatprep.mubr.f32.mxu0 0.0
    %111 = vmatmul.mubr.f32.gmra.mrb[0].mxu0 %v29
    %v112 = vpop.f32.mrb[0].mxu0
    %v113 = vadd.f32 0.0, %v112
    %v114 = vpop.f32.mrb[0].mxu0
    %115 = vmatprep.mubr.f32.mxu0 0.0
    %116 = vmatmul.mubr.f32.gmra.mrb[0].mxu0 %v32
    %v117 = vpop.f32.mrb[0].mxu0
    %v118 = vadd.f32 0.0, %v117
    %v119 = vpop.f32.mrb[0].mxu0
    %120 = vmatprep.mubr.f32.mxu0 0.0
    %121 = vmatmul.mubr.f32.gmra.mrb[0].mxu0 %v35
    %v122 = vpop.f32.mrb[0].mxu0
    %v123 = vadd.f32 0.0, %v122
    %v124 = vpop.f32.mrb[0].mxu0
    %125 = vmatprep.mubr.f32.mxu0 0.0
    %126 = vmatmul.mubr.f32.gmra.mrb[0].mxu0 %v38
    %v127 = vpop.f32.mrb[0].mxu0
    %v128 = vadd.f32 0.0, %v127
    %v129 = vpop.f32.mrb[0].mxu0
    %130 = vmatprep.mubr.f32.mxu0 0.0
    %131 = vmatmul.mubr.f32.gmra.mrb[0].mxu0 %v41
    %v132 = vpop.f32.mrb[0].mxu0
    %v133 = vadd.f32 0.0, %v132
    %v134 = vpop.f32.mrb[0].mxu0
    %135 = vmatprep.mubr.f32.mxu0 0.0
    %136 = vmatmul.mubr.f32.gmra.mrb[0].mxu0 %v44
    %v137 = vpop.f32.mrb[0].mxu0
    %v138 = vadd.f32 0.0, %v137
    %v139 = vpop.f32.mrb[0].mxu0
    %140 = vdwg.mxu0
    %v141 = vld [vmem:[%s2] sm:$0xff]
    %v142 = vld [vmem:[%s2 + $0x8] sm:$0xff]
    %v143 = vld [vmem:[%s2 + $0x10] sm:$0xff]
    %v144 = vld [vmem:[%s2 + $0x18] sm:$0xff]
    %v145 = vld [vmem:[%s2 + $0x20] sm:$0xff]
    %v146 = vld [vmem:[%s2 + $0x28] sm:$0xff]
    %v147 = vmul.f32 %v113, %v141
    %v148 = vmul.f32 %v118, %v142
    %v149 = vmul.f32 %v123, %v143
    %v150 = vmul.f32 %v128, %v144
    %v151 = vmul.f32 %v133, %v145
    %v152 = vmul.f32 %v138, %v146
    %vm153 = vcmask 130048
    %v154 = vsel %vm153, %v147, 0.0
    %v155 = vsel %vm153, %v148, 0.0
    %v156 = vadd.f32 %v154, %v155
    %v157 = vsel %vm153, %v149, 0.0
    %v158 = vadd.f32 %v156, %v157
    %v159 = vsel %vm153, %v150, 0.0
    %v160 = vadd.f32 %v158, %v159
    %v161 = vsel %vm153, %v151, 0.0
    %v162 = vadd.f32 %v160, %v161
    %v163 = vsel %vm153, %v152, 0.0
    %v164 = vadd.f32 %v162, %v163
    %v165 = vrot.slane %v164, 4
    %v166 = vadd.f32 %v164, %v165
    %v167 = vrot.slane %v166, 2
    %v168 = vadd.f32 %v166, %v167
    %v169 = vrot.slane %v168, 1
    %v170 = vadd.f32 %v168, %v169
    %v171 = vmul.f32 %v113, %v113
    %v172 = vmul.f32 %v118, %v118
    %v173 = vmul.f32 %v123, %v123
    %v174 = vmul.f32 %v128, %v128
    %v175 = vmul.f32 %v133, %v133
    %v176 = vmul.f32 %v138, %v138
    %v177 = vsel %vm153, %v171, 0.0
    %v178 = vsel %vm153, %v172, 0.0
    %v179 = vadd.f32 %v177, %v178
    %v180 = vsel %vm153, %v173, 0.0
    %v181 = vadd.f32 %v179, %v180
    %v182 = vsel %vm153, %v174, 0.0
    %v183 = vadd.f32 %v181, %v182
    %v184 = vsel %vm153, %v175, 0.0
    %v185 = vadd.f32 %v183, %v184
    %v186 = vsel %vm153, %v176, 0.0
    %v187 = vadd.f32 %v185, %v186
    %v188 = vrot.slane %v187, 4
    %v189 = vadd.f32 %v187, %v188
    %v190 = vrot.slane %v189, 2
    %v191 = vadd.f32 %v189, %v190
    %v192 = vrot.slane %v191, 1
    %v193 = vadd.f32 %v191, %v192
    %v194 = vmul.f32 %v141, %v141
    %v195 = vmul.f32 %v142, %v142
    %v196 = vmul.f32 %v143, %v143
    %v197 = vmul.f32 %v144, %v144
    %v198 = vmul.f32 %v145, %v145
    %v199 = vmul.f32 %v146, %v146
    %v200 = vsel %vm153, %v194, 0.0
    %v201 = vsel %vm153, %v195, 0.0
    %v202 = vadd.f32 %v200, %v201
    %v203 = vsel %vm153, %v196, 0.0
    %v204 = vadd.f32 %v202, %v203
    %v205 = vsel %vm153, %v197, 0.0
    %v206 = vadd.f32 %v204, %v205
    %v207 = vsel %vm153, %v198, 0.0
    %v208 = vadd.f32 %v206, %v207
    %v209 = vsel %vm153, %v199, 0.0
    %v210 = vadd.f32 %v208, %v209
    %v211 = vrot.slane %v210, 4
    %v212 = vadd.f32 %v210, %v211
    %v213 = vrot.slane %v212, 2
    %v214 = vadd.f32 %v212, %v213
    %v215 = vrot.slane %v214, 1
    %v216 = vadd.f32 %v214, %v215
    %v217 = vrsqrt.pop %v193
    %v218 = vmul.f32 %v193, %v217
    %vm219 = vcmp.eq.f32.partialorder %v193, inf
    %v220 = vsel %vm219, %v193, %v218
    %vm221 = vcmp.eq.f32.partialorder %v193, 0.0
    %v222 = vand.u32 %v193, 2147483648
    %v223 = vsel %vm221, %v222, %v220
    %v224 = vmax.f32 %v223, 1e-08
    %v225 = vrsqrt.pop %v216
    %v226 = vmul.f32 %v216, %v225
    %vm227 = vcmp.eq.f32.partialorder %v216, inf
    %v228 = vsel %vm227, %v216, %v226
    %vm229 = vcmp.eq.f32.partialorder %v216, 0.0
    %v230 = vand.u32 %v216, 2147483648
    %v231 = vsel %vm229, %v230, %v228
    %v232 = vmax.f32 %v231, 1e-08
    %v233 = vmul.f32 %v224, %v232
    %v234 = vrcp.pop %v233
    %v235 = vmul.f32 %v170, %v234
    %vm236 = vcmask 122880
    %237 = vst.msk [vmem:[#allocation2] sm:$0x1] %vm236, %v235
    // Predicated region
    $region14: #{tpu_custom_call.1} parent=1 // pred_check
      _
    $region15: #{tpu_custom_call.1} parent=1 // pred_check_branch
      %239 = sbr.rel (0) target = $region17
    $region16: #{tpu_custom_call.1} parent=1 // pred_region
      %s241 = ssub.s32 16, 16
      %242 = vsyncadd [#allocation3], %s241
      %s244 = sshll.u32 [#allocation2], 4
      %s245 = int_to_ptr.vmem [resolvable:$true] %s244
      %247 = dma.vmem_to_hbm [thread:$0]  %s245, 16, %s3, [#allocation3]
    $region17: #{tpu_custom_call.1} parent=1 // pred_fallthru
      _
    // Predicated region
    $region18: #{tpu_custom_call.1} parent=1 // pred_check
      _
    $region19: #{tpu_custom_call.1} parent=1 // pred_check_branch
      %249 = sbr.rel (0) target = $region21
    $region20: #{tpu_custom_call.1} parent=1 // pred_region
      %250 = dma.done [#allocation3], 16
    $region21: #{tpu_custom_call.1} parent=1 // pred_fallthru
      _
    %251 = vsyncpa [#allocation3], 1

</llo_original>
